<compile_context>
chip_gen: v7x
topology: tpu7x:2x2x1
jax: 0.10.0
libtpu: 0.0.40
codegen_flags: <defaults>
</compile_context>

<pallas_src>
import functools

import jax
import jax.numpy as jnp
from jax.experimental import pallas as pl
from jax.experimental.pallas import tpu as pltpu

_LANE = 128


def mlp_kernel(xt_ref, w1_ref, b1_ref, w2_ref, b2_ref, w3_ref, b3_ref, ot_ref):
    # Batch lives on the lane axis (last dim) for every tensor below, so all
    # loads/stores are lane-dense and the three matmuls go straight to the MXU
    # with f32 accumulation.  ReLU / sigmoid run on the VPU / EUP.
    xt = xt_ref[...]                                                 # (F,  Bt)

    h1 = jnp.dot(w1_ref[...], xt,
                 preferred_element_type=jnp.float32) + b1_ref[...]   # (20, Bt)
    h1 = jnp.maximum(h1, 0.0)

    h2 = jnp.dot(w2_ref[...], h1,
                 preferred_element_type=jnp.float32) + b2_ref[...]   # (5,  Bt)
    h2 = jnp.maximum(h2, 0.0)

    h3 = jnp.dot(w3_ref[...], h2,
                 preferred_element_type=jnp.float32) + b3_ref[...]   # (1,  Bt)

    ot_ref[...] = jax.nn.sigmoid(h3).astype(ot_ref.dtype)            # lane-dense store


@functools.partial(jax.jit, static_argnames=("block_b",))
def mlp_forward(x, w1, b1, w2, b2, w3, b3, *, block_b=1024):
    """x: (B, F). Weights in PyTorch layout: w_k (out_k, in_k), b_k (out_k,).
    Returns (B, 1)."""
    B, F = x.shape
    H1, H2, H3 = w1.shape[0], w2.shape[0], w3.shape[0]

    # Lane-aligned batch tile: multiple of 128, no larger than needed.
    eff_b = min(block_b, pl.cdiv(B, _LANE) * _LANE)
    eff_b = max(_LANE, pl.cdiv(eff_b, _LANE) * _LANE)
    b_pad = pl.cdiv(B, eff_b) * eff_b

    # Transpose to batch-on-lanes (layout plumbing in the wrapper) and pad the
    # batch; padded columns are discarded after the kernel.
    xt = x.T                                           # (F, B)
    if b_pad != B:
        xt = jnp.pad(xt, ((0, 0), (0, b_pad - B)))

    # Biases as columns so they broadcast over the lane (batch) axis.
    b1c = b1.reshape(H1, 1)
    b2c = b2.reshape(H2, 1)
    b3c = b3.reshape(H3, 1)

    grid = (b_pad // eff_b,)
    # Constant block index -> weights/biases stay resident in VMEM across steps.
    full = lambda shape: pl.BlockSpec(shape, lambda i: (0, 0))

    out_t = pl.pallas_call(
        mlp_kernel,
        out_shape=jax.ShapeDtypeStruct((H3, b_pad), x.dtype),
        grid_spec=pltpu.PrefetchScalarGridSpec(
            num_scalar_prefetch=0,
            grid=grid,
            in_specs=[
                pl.BlockSpec((F, eff_b), lambda i: (0, i)),   # x^T batch tile
                full((H1, F)), full((H1, 1)),                 # fc1
                full((H2, H1)), full((H2, 1)),                # fc2
                full((H3, H2)), full((H3, 1)),                # fc3
            ],
            out_specs=pl.BlockSpec((H3, eff_b), lambda i: (0, i)),
        ),
        compiler_params=pltpu.CompilerParams(
            dimension_semantics=("parallel",)),
    )(xt, w1, b1c, w2, b2c, w3, b3c)

    return out_t[:, :B].T                              # (B, H3)


def init_params(key, in_features):
    """Matches the PyTorch module: kaiming_normal_ weights (fan_in, gain sqrt(2)),
    default nn.Linear uniform(-1/sqrt(fan_in), 1/sqrt(fan_in)) biases.
    Weights kept in PyTorch layout (out_features, in_features)."""
    dims = [(in_features, 20), (20, 5), (5, 1)]
    keys = jax.random.split(key, 2 * len(dims))
    params = []
    for idx, (fan_in, fan_out) in enumerate(dims):
        wk, bk = keys[2 * idx], keys[2 * idx + 1]
        std = jnp.sqrt(2.0 / fan_in)
        w = std * jax.random.normal(wk, (fan_out, fan_in), dtype=jnp.float32)
        bound = 1.0 / jnp.sqrt(fan_in)
        b = jax.random.uniform(bk, (fan_out,), dtype=jnp.float32,
                               minval=-bound, maxval=bound)
        params += [w, b]
    return params


def _reference(x, w1, b1, w2, b2, w3, b3):
    h = jnp.maximum(x @ w1.T + b1, 0.0)
    h = jnp.maximum(h @ w2.T + b2, 0.0)
    return jax.nn.sigmoid(h @ w3.T + b3)


if __name__ == "__main__":
    key = jax.random.PRNGKey(0)
    xkey, pkey, x2key = jax.random.split(key, 3)

    batch, in_features = 8, 32
    x = jax.random.normal(xkey, (batch, in_features), dtype=jnp.float32)
    w1, b1, w2, b2, w3, b3 = init_params(pkey, in_features)

    # Small-batch check (single padded tile).
    out = mlp_forward(x, w1, b1, w2, b2, w3, b3, block_b=1024)
    out = jax.block_until_ready(out)
    ref = _reference(x, w1, b1, w2, b2, w3, b3)
    assert out.shape == (batch, 1)
    assert jnp.allclose(out, ref, atol=1e-5, rtol=1e-5)

    # Non-multiple batch with multiple parallel grid steps (padding + megacore path).
    batch2 = 300
    x2 = jax.random.normal(x2key, (batch2, in_features), dtype=jnp.float32)
    out2 = mlp_forward(x2, w1, b1, w2, b2, w3, b3, block_b=128)
    out2 = jax.block_until_ready(out2)
    ref2 = _reference(x2, w1, b1, w2, b2, w3, b3)
    assert out2.shape == (batch2, 1)
    assert jnp.allclose(out2, ref2, atol=1e-5, rtol=1e-5)

    print("KERNEL_OK")
</pallas_src>

<mosaic_0001>
module attributes {stable_mosaic.version = 11 : i64} {
  func.func @mlp_kernel(%arg0: i32, %arg1: memref<32x128xf32, #tpu.memory_space<vmem>>, %arg2: memref<20x32xf32, #tpu.memory_space<vmem>>, %arg3: memref<20x1xf32, #tpu.memory_space<vmem>>, %arg4: memref<5x20xf32, #tpu.memory_space<vmem>>, %arg5: memref<5x1xf32, #tpu.memory_space<vmem>>, %arg6: memref<1x5xf32, #tpu.memory_space<vmem>>, %arg7: memref<1x1xf32, #tpu.memory_space<vmem>>, %arg8: memref<1x128xf32, #tpu.memory_space<vmem>>) attributes {dimension_semantics = [#tpu.dimension_semantics<parallel>], iteration_bounds = array<i64: 1>, scalar_prefetch = 0 : i64, scratch_operands = 0 : i64, tpu.core_type = #tpu.core_type<tc>, window_params = [{transform_indices = @transform_0, window_bounds = array<i64: 32, 128>}, {pipeline_mode = #tpu.pipeline_mode<synchronous>, transform_indices = @transform_1, window_bounds = array<i64: 20, 32>}, {pipeline_mode = #tpu.pipeline_mode<synchronous>, transform_indices = @transform_2, window_bounds = array<i64: 20, 1>}, {pipeline_mode = #tpu.pipeline_mode<synchronous>, transform_indices = @transform_3, window_bounds = array<i64: 5, 20>}, {pipeline_mode = #tpu.pipeline_mode<synchronous>, transform_indices = @transform_4, window_bounds = array<i64: 5, 1>}, {pipeline_mode = #tpu.pipeline_mode<synchronous>, transform_indices = @transform_5, window_bounds = array<i64: 1, 5>}, {pipeline_mode = #tpu.pipeline_mode<synchronous>, transform_indices = @transform_6, window_bounds = array<i64: 1, 1>}, {transform_indices = @transform_7, window_bounds = array<i64: 1, 128>}]} {
    %c0 = arith.constant 0 : index
    %c0_0 = arith.constant 0 : index
    %0 = vector.load %arg1[%c0, %c0_0] : memref<32x128xf32, #tpu.memory_space<vmem>>, vector<32x128xf32>
    %c0_1 = arith.constant 0 : index
    %c0_2 = arith.constant 0 : index
    %1 = vector.load %arg2[%c0_1, %c0_2] : memref<20x32xf32, #tpu.memory_space<vmem>>, vector<20x32xf32>
    %cst = arith.constant dense<0.000000e+00> : vector<20x128xf32>
    %2 = tpu.matmul %1, %0, %cst {dimension_numbers = #tpu.dot_dimension_numbers<[1], [0], [0], [1], [0, 0, 1, 1], [], []>} : vector<20x32xf32>, vector<32x128xf32>, vector<20x128xf32> -> vector<20x128xf32>
    %c0_3 = arith.constant 0 : index
    %c0_4 = arith.constant 0 : index
    %3 = vector.load %arg3[%c0_3, %c0_4] : memref<20x1xf32, #tpu.memory_space<vmem>>, vector<20x1xf32>
    %4 = vector.broadcast %3 : vector<20x1xf32> to vector<20x128xf32>
    %5 = arith.addf %2, %4 : vector<20x128xf32>
    %cst_5 = arith.constant 0.000000e+00 : f32
    %6 = vector.broadcast %cst_5 : f32 to vector<20x128xf32>
    %7 = arith.maximumf %5, %6 : vector<20x128xf32>
    %c0_6 = arith.constant 0 : index
    %c0_7 = arith.constant 0 : index
    %8 = vector.load %arg4[%c0_6, %c0_7] : memref<5x20xf32, #tpu.memory_space<vmem>>, vector<5x20xf32>
    %cst_8 = arith.constant dense<0.000000e+00> : vector<5x128xf32>
    %9 = tpu.matmul %8, %7, %cst_8 {dimension_numbers = #tpu.dot_dimension_numbers<[1], [0], [0], [1], [0, 0, 1, 1], [], []>} : vector<5x20xf32>, vector<20x128xf32>, vector<5x128xf32> -> vector<5x128xf32>
    %c0_9 = arith.constant 0 : index
    %c0_10 = arith.constant 0 : index
    %10 = vector.load %arg5[%c0_9, %c0_10] : memref<5x1xf32, #tpu.memory_space<vmem>>, vector<5x1xf32>
    %11 = vector.broadcast %10 : vector<5x1xf32> to vector<5x128xf32>
    %12 = arith.addf %9, %11 : vector<5x128xf32>
    %cst_11 = arith.constant 0.000000e+00 : f32
    %13 = vector.broadcast %cst_11 : f32 to vector<5x128xf32>
    %14 = arith.maximumf %12, %13 : vector<5x128xf32>
    %c0_12 = arith.constant 0 : index
    %c0_13 = arith.constant 0 : index
    %15 = vector.load %arg6[%c0_12, %c0_13] : memref<1x5xf32, #tpu.memory_space<vmem>>, vector<1x5xf32>
    %cst_14 = arith.constant dense<0.000000e+00> : vector<1x128xf32>
    %16 = tpu.matmul %15, %14, %cst_14 {dimension_numbers = #tpu.dot_dimension_numbers<[1], [0], [0], [1], [0, 0, 1, 1], [], []>} : vector<1x5xf32>, vector<5x128xf32>, vector<1x128xf32> -> vector<1x128xf32>
    %c0_15 = arith.constant 0 : index
    %c0_16 = arith.constant 0 : index
    %17 = vector.load %arg7[%c0_15, %c0_16] : memref<1x1xf32, #tpu.memory_space<vmem>>, vector<1x1xf32>
    %18 = vector.broadcast %17 : vector<1x1xf32> to vector<1x128xf32>
    %19 = arith.addf %16, %18 : vector<1x128xf32>
    %20 = arith.negf %19 : vector<1x128xf32>
    %21 = math.exp %20 : vector<1x128xf32>
    %cst_17 = arith.constant 1.000000e+00 : f32
    %22 = vector.broadcast %cst_17 : f32 to vector<1x128xf32>
    %23 = arith.addf %22, %21 : vector<1x128xf32>
    %24 = arith.divf %22, %23 : vector<1x128xf32>
    %c0_18 = arith.constant 0 : index
    %c0_19 = arith.constant 0 : index
    %25 = vector.load %arg8[%c0_18, %c0_19] : memref<1x128xf32, #tpu.memory_space<vmem>>, vector<1x128xf32>
    tpu.vector_store %arg8[%c0_18, %c0_19], %24 {strides = array<i32>} : memref<1x128xf32, #tpu.memory_space<vmem>>, vector<1x128xf32>,
    return
  }
  func.func @transform_0(%arg0: i32) -> (i32, i32) {
    %c0_i32 = arith.constant 0 : i32
    %c0_i32_0 = arith.constant 0 : i32
    return %c0_i32, %arg0 : i32, i32
  }
  func.func @transform_1(%arg0: i32) -> (i32, i32) {
    %c0_i32 = arith.constant 0 : i32
    %c0_i32_0 = arith.constant 0 : i32
    %c0_i32_1 = arith.constant 0 : i32
    return %c0_i32, %c0_i32_0 : i32, i32
  }
  func.func @transform_2(%arg0: i32) -> (i32, i32) {
    %c0_i32 = arith.constant 0 : i32
    %c0_i32_0 = arith.constant 0 : i32
    %c0_i32_1 = arith.constant 0 : i32
    return %c0_i32, %c0_i32_0 : i32, i32
  }
  func.func @transform_3(%arg0: i32) -> (i32, i32) {
    %c0_i32 = arith.constant 0 : i32
    %c0_i32_0 = arith.constant 0 : i32
    %c0_i32_1 = arith.constant 0 : i32
    return %c0_i32, %c0_i32_0 : i32, i32
  }
  func.func @transform_4(%arg0: i32) -> (i32, i32) {
    %c0_i32 = arith.constant 0 : i32
    %c0_i32_0 = arith.constant 0 : i32
    %c0_i32_1 = arith.constant 0 : i32
    return %c0_i32, %c0_i32_0 : i32, i32
  }
  func.func @transform_5(%arg0: i32) -> (i32, i32) {
    %c0_i32 = arith.constant 0 : i32
    %c0_i32_0 = arith.constant 0 : i32
    %c0_i32_1 = arith.constant 0 : i32
    return %c0_i32, %c0_i32_0 : i32, i32
  }
  func.func @transform_6(%arg0: i32) -> (i32, i32) {
    %c0_i32 = arith.constant 0 : i32
    %c0_i32_0 = arith.constant 0 : i32
    %c0_i32_1 = arith.constant 0 : i32
    return %c0_i32, %c0_i32_0 : i32, i32
  }
  func.func @transform_7(%arg0: i32) -> (i32, i32) {
    %c0_i32 = arith.constant 0 : i32
    %c0_i32_0 = arith.constant 0 : i32
    return %c0_i32, %arg0 : i32, i32
  }
}

</mosaic_0001>

<llo_original>
// kernel: mlp_forward.1
$region0: #{mlp_forward.1}
  #allocation0 [shape = 'u32[]', space=smem, size = 0x4, offset = 0x4, fixed_abs, tag = 'smem constant byte address 0x4 - core index']
  #allocation1 [shape = 'u32[144,128]{1,0:T(1,128)}', space=vmem, size = 0x12000, scoped, tag = 'internal scratch']
  #allocation2 [shape = 'f32[1,1]{1,0:T(1,128)S(1)}', space=vmem, size = 0x200, scoped, tag = 'scoped memory for mlp_forward.1']
  %s0 = inlined_call_operand.vmem [shape: f32[32,128], index: 0, kind: input, shape index: {}]
  %s1 = inlined_call_operand.vmem [shape: f32[20,32], index: 1, kind: input, shape index: {}]
  %s2 = inlined_call_operand.vmem [shape: f32[20,1], index: 2, kind: input, shape index: {}]
  %s3 = inlined_call_operand.vmem [shape: f32[5,20], index: 3, kind: input, shape index: {}]
  %s4 = inlined_call_operand.vmem [shape: f32[5,1], index: 4, kind: input, shape index: {}]
  %s5 = inlined_call_operand.vmem [shape: f32[1,5], index: 5, kind: input, shape index: {}]
  %s6 = inlined_call_operand.<no memory space> [shape: f32[1,1], index: 6, kind: input, shape index: {}]
  %s7 = inlined_call_operand.vmem [shape: f32[1,128], index: 7, kind: output, shape index: {}]
  %s8 = sld [smem:[#allocation0]]
  $region38: #{mlp_forward.1} parent=0
    _
  %s10 = ssub.s32 1, %s8
  %s11 = scalar_select 0, %s10, %s8
  %v12 = vstv %s6
  %13 = vst [vmem:[#allocation2] sm:$0x1] %v12
  // Predicated region
  $region2: #{mlp_forward.1} parent=0 // pred_check
    _
  $region3: #{mlp_forward.1} parent=0 // pred_check_branch
    %15 = sbr.rel (0) target = $region5
  $region4: #{mlp_forward.1} parent=0 // pred_region
    _
  $region5: #{mlp_forward.1} parent=0 // pred_fallthru
    _
  // Predicated region
  $region6: #{mlp_forward.1} parent=0 // pred_check
    _
  $region7: #{mlp_forward.1} parent=0 // pred_check_branch
    %17 = sbr.rel (0) target = $region9
  $region8: #{mlp_forward.1} parent=0 // pred_region
    _
  $region9: #{mlp_forward.1} parent=0 // pred_fallthru
    _
  // Predicated region
  $region10: #{mlp_forward.1} parent=0 // pred_check
    _
  $region11: #{mlp_forward.1} parent=0 // pred_check_branch
    %19 = sbr.rel (0) target = $region13
  $region12: #{mlp_forward.1} parent=0 // pred_region
    _
  $region13: #{mlp_forward.1} parent=0 // pred_fallthru
    _
  // Predicated region
  $region14: #{mlp_forward.1} parent=0 // pred_check
    _
  $region15: #{mlp_forward.1} parent=0 // pred_check_branch
    %21 = sbr.rel (0) target = $region17
  $region16: #{mlp_forward.1} parent=0 // pred_region
    _
  $region17: #{mlp_forward.1} parent=0 // pred_fallthru
    _
  // Predicated region
  $region18: #{mlp_forward.1} parent=0 // pred_check
    _
  $region19: #{mlp_forward.1} parent=0 // pred_check_branch
    %23 = sbr.rel (0) target = $region21
  $region20: #{mlp_forward.1} parent=0 // pred_region
    _
  $region21: #{mlp_forward.1} parent=0 // pred_fallthru
    _
  // Predicated region
  $region22: #{mlp_forward.1} parent=0 // pred_check
    _
  $region23: #{mlp_forward.1} parent=0 // pred_check_branch
    %25 = sbr.rel (0) target = $region25
  $region24: #{mlp_forward.1} parent=0 // pred_region
    _
  $region25: #{mlp_forward.1} parent=0 // pred_fallthru
    _
  // Predicated region
  $region26: #{mlp_forward.1} parent=0 // pred_check
    _
  $region27: #{mlp_forward.1} parent=0 // pred_check_branch
    %27 = sbr.rel (0) target = $region29
  $region28: #{mlp_forward.1} parent=0 // pred_region
    _
  $region29: #{mlp_forward.1} parent=0 // pred_fallthru
    _
  %v28 = vld [vmem:[%s0] sm:$0xff]
  %v29 = vld [vmem:[%s0 + $0x8] sm:$0xff]
  %v30 = vld [vmem:[%s0 + $0x10] sm:$0xff]
  %v31 = vld [vmem:[%s0 + $0x18] sm:$0xff]
  %v32 = vld [vmem:[%s1] sm:$0xff]
  %v33 = vld [vmem:[%s1 + $0x8] sm:$0xff]
  %v34 = vld [vmem:[%s1 + $0x10] sm:$0xf]
  %v35 = vld [vmem:[%s2] sm:$0xff]
  %v36 = vld [vmem:[%s2 + $0x8] sm:$0xff]
  %v37 = vld [vmem:[%s2 + $0x10] sm:$0xf]
  %39 = vset.pattern.permute.xlu0 0
  %40 = vperm.xlu0 %39, %v35
  %v41 = vpop.permute.xlu0 %40
  %44 = vset.pattern.permute.xlu0 0
  %45 = vperm.xlu0 %44, %v36
  %v46 = vpop.permute.xlu0 %45
  %49 = vset.pattern.permute.xlu0 0
  %50 = vperm.xlu0 %49, %v37
  %v51 = vpop.permute.xlu0 %50
  %vm53 = vcmask 261120
  %v55 = vsel %vm53, %v32, 0
  %v58 = vsel %vm53, %v33, 0
  %v61 = vsel %vm53, %v34, 0
  %63 = vmatprep.subr.mxu0 0.0
  %64 = vmatpush1.msra.mxu0 %v28
  %65 = vmatprep.subr.mxu0 0.0
  %66 = vmatpush1.msra.mxu0 %v29
  %67 = vmatprep.subr.mxu0 0.0
  %68 = vmatpush1.msra.mxu0 %v30
  %69 = vmatprep.subr.mxu0 0.0
  %70 = vmatpush1.msra.mxu0 %v31
  %71 = vmatprep.subr.mxu0 0.0
  %72 = vmatpush1.msra.mxu0 0.0
  %73 = vmatprep.subr.mxu0 0.0
  %74 = vmatpush1.msra.mxu0 0.0
  %75 = vmatprep.subr.mxu0 0.0
  %76 = vmatpush1.msra.mxu0 0.0
  %77 = vmatprep.subr.mxu0 0.0
  %78 = vmatpush1.msra.mxu0 0.0
  %79 = vmatprep.subr.mxu0 0.0
  %80 = vmatpush1.msra.mxu0 0.0
  %81 = vmatprep.subr.mxu0 0.0
  %82 = vmatpush1.msra.mxu0 0.0
  %83 = vmatprep.subr.mxu0 0.0
  %84 = vmatpush1.msra.mxu0 0.0
  %85 = vmatprep.subr.mxu0 0.0
  %86 = vmatpush1.msra.mxu0 0.0
  %87 = vmatprep.subr.mxu0 0.0
  %88 = vmatpush1.msra.mxu0 0.0
  %89 = vmatprep.subr.mxu0 0.0
  %90 = vmatpush1.msra.mxu0 0.0
  %91 = vmatprep.subr.mxu0 0.0
  %92 = vmatpush1.msra.mxu0 0.0
  %93 = vmatprep.subr.mxu0 0.0
  %94 = vmatpush1.msra.mxu0 0.0
  %95 = vmatprep.subr.mxu0 0.0
  %96 = vmatpush1.msra.mxu0 0.0
  %97 = vmatprep.subr.mxu0 0.0
  %98 = vmatpush1.msra.mxu0 0.0
  %99 = vmatprep.subr.mxu0 0.0
  %100 = vmatpush1.msra.mxu0 0.0
  %101 = vmatprep.subr.mxu0 0.0
  %102 = vmatpush1.msra.mxu0 0.0
  %103 = vmatprep.subr.mxu0 0.0
  %104 = vmatpush1.msra.mxu0 0.0
  %105 = vmatprep.subr.mxu0 0.0
  %106 = vmatpush1.msra.mxu0 0.0
  %107 = vmatprep.subr.mxu0 0.0
  %108 = vmatpush1.msra.mxu0 0.0
  %109 = vmatprep.subr.mxu0 0.0
  %110 = vmatpush1.msra.mxu0 0.0
  %111 = vmatprep.subr.mxu0 0.0
  %112 = vmatpush1.msra.mxu0 0.0
  %113 = vmatprep.subr.mxu0 0.0
  %114 = vmatpush1.msra.mxu0 0.0
  %115 = vmatprep.subr.mxu0 0.0
  %116 = vmatpush1.msra.mxu0 0.0
  %117 = vmatprep.subr.mxu0 0.0
  %118 = vmatpush1.msra.mxu0 0.0
  %119 = vmatprep.subr.mxu0 0.0
  %120 = vmatpush1.msra.mxu0 0.0
  %121 = vmatprep.subr.mxu0 0.0
  %122 = vmatpush1.msra.mxu0 0.0
  %123 = vmatprep.subr.mxu0 0.0
  %124 = vmatpush1.msra.mxu0 0.0
  %125 = vmatprep.subr.mxu0 0.0
  %126 = vmatpush1.msra.mxu0 0.0
  %127 = vmatprep.mubr.f32.mxu0 0.0
  %128 = vmatmul.mubr.f32.gmra.mrb[0].mxu0 %v55
  %v129 = vpop.f32.mrb[0].mxu0
  %v130 = vadd.f32 %v41, %v129
  %v131 = vpop.f32.mrb[0].mxu0
  %132 = vmatprep.mubr.f32.mxu0 0.0
  %133 = vmatmul.mubr.f32.gmra.mrb[0].mxu0 %v58
  %v134 = vpop.f32.mrb[0].mxu0
  %v135 = vadd.f32 %v46, %v134
  %v136 = vpop.f32.mrb[0].mxu0
  %137 = vmatprep.mubr.f32.mxu0 0.0
  %138 = vmatmul.mubr.f32.gmra.mrb[0].mxu0 %v61
  %v139 = vpop.f32.mrb[0].mxu0
  %v140 = vadd.f32 %v51, %v139
  %v141 = vpop.f32.mrb[0].mxu0
  %142 = vdwg.mxu0
  %v143 = vmax.f32 %v130, 0.0
  %v144 = vmax.f32 %v135, 0.0
  %v145 = vmax.f32 %v140, 0.0
  %v146 = vld [vmem:[%s3] sm:$0x1f]
  %v147 = vld [vmem:[%s4] sm:$0x1f]
  %149 = vset.pattern.permute.xlu0 0
  %150 = vperm.xlu0 %149, %v147
  %v151 = vpop.permute.xlu0 %150
  %vm153 = vcmask 162816
  %v155 = vsel %vm153, %v146, 0
  %vm157 = vcmask 1043456
  %v159 = vsel %vm157, %v145, 0
  %161 = vmatprep.subr.mxu0 0.0
  %162 = vmatpush1.msra.mxu0 %v143
  %163 = vmatprep.subr.mxu0 0.0
  %164 = vmatpush1.msra.mxu0 %v144
  %165 = vmatprep.subr.mxu0 0.0
  %166 = vmatpush1.msra.mxu0 %v159
  %167 = vmatprep.subr.mxu0 0.0
  %168 = vmatpush1.msra.mxu0 0.0
  %169 = vmatprep.subr.mxu0 0.0
  %170 = vmatpush1.msra.mxu0 0.0
  %171 = vmatprep.subr.mxu0 0.0
  %172 = vmatpush1.msra.mxu0 0.0
  %173 = vmatprep.subr.mxu0 0.0
  %174 = vmatpush1.msra.mxu0 0.0
  %175 = vmatprep.subr.mxu0 0.0
  %176 = vmatpush1.msra.mxu0 0.0
  %177 = vmatprep.subr.mxu0 0.0
  %178 = vmatpush1.msra.mxu0 0.0
  %179 = vmatprep.subr.mxu0 0.0
  %180 = vmatpush1.msra.mxu0 0.0
  %181 = vmatprep.subr.mxu0 0.0
  %182 = vmatpush1.msra.mxu0 0.0
  %183 = vmatprep.subr.mxu0 0.0
  %184 = vmatpush1.msra.mxu0 0.0
  %185 = vmatprep.subr.mxu0 0.0
  %186 = vmatpush1.msra.mxu0 0.0
  %187 = vmatprep.subr.mxu0 0.0
  %188 = vmatpush1.msra.mxu0 0.0
  %189 = vmatprep.subr.mxu0 0.0
  %190 = vmatpush1.msra.mxu0 0.0
  %191 = vmatprep.subr.mxu0 0.0
  %192 = vmatpush1.msra.mxu0 0.0
  %193 = vmatprep.subr.mxu0 0.0
  %194 = vmatpush1.msra.mxu0 0.0
  %195 = vmatprep.subr.mxu0 0.0
  %196 = vmatpush1.msra.mxu0 0.0
  %197 = vmatprep.subr.mxu0 0.0
  %198 = vmatpush1.msra.mxu0 0.0
  %199 = vmatprep.subr.mxu0 0.0
  %200 = vmatpush1.msra.mxu0 0.0
  %201 = vmatprep.subr.mxu0 0.0
  %202 = vmatpush1.msra.mxu0 0.0
  %203 = vmatprep.subr.mxu0 0.0
  %204 = vmatpush1.msra.mxu0 0.0
  %205 = vmatprep.subr.mxu0 0.0
  %206 = vmatpush1.msra.mxu0 0.0
  %207 = vmatprep.subr.mxu0 0.0
  %208 = vmatpush1.msra.mxu0 0.0
  %209 = vmatprep.subr.mxu0 0.0
  %210 = vmatpush1.msra.mxu0 0.0
  %211 = vmatprep.subr.mxu0 0.0
  %212 = vmatpush1.msra.mxu0 0.0
  %213 = vmatprep.subr.mxu0 0.0
  %214 = vmatpush1.msra.mxu0 0.0
  %215 = vmatprep.subr.mxu0 0.0
  %216 = vmatpush1.msra.mxu0 0.0
  %217 = vmatprep.subr.mxu0 0.0
  %218 = vmatpush1.msra.mxu0 0.0
  %219 = vmatprep.subr.mxu0 0.0
  %220 = vmatpush1.msra.mxu0 0.0
  %221 = vmatprep.subr.mxu0 0.0
  %222 = vmatpush1.msra.mxu0 0.0
  %223 = vmatprep.subr.mxu0 0.0
  %224 = vmatpush1.msra.mxu0 0.0
  %225 = vmatprep.mubr.f32.mxu0 0.0
  %226 = vmatmul.mubr.f32.gmra.mrb[0].mxu0 %v155
  %v227 = vpop.f32.mrb[0].mxu0
  %v228 = vadd.f32 %v151, %v227
  %v229 = vpop.f32.mrb[0].mxu0
  %230 = vdwg.mxu0
  %v231 = vmax.f32 %v228, 0.0
  %v232 = vld [vmem:[%s5] sm:$0x1]
  %v233 = vld [vmem:[#allocation2] sm:$0x1]
  %235 = vset.pattern.permute.xlu0 0
  %236 = vperm.xlu0 %235, %v233
  %v237 = vpop.permute.xlu0 %236
  %v239 = vlaneseq
  %v240 = vshrl.u32 %v239, 7
  %v241 = vsub.s32 0, %v240
  %v242 = vrot.slane %v237, %v241
  %vm243 = vcmask 39936
  %v245 = vsel %vm243, %v232, 0
  %vm247 = vcmask 1044480
  %v249 = vsel %vm247, %v231, 0
  %251 = vmatprep.subr.mxu0 0.0
  %252 = vmatpush1.msra.mxu0 %v249
  %253 = vmatprep.subr.mxu0 0.0
  %254 = vmatpush1.msra.mxu0 0.0
  %255 = vmatprep.subr.mxu0 0.0
  %256 = vmatpush1.msra.mxu0 0.0
  %257 = vmatprep.subr.mxu0 0.0
  %258 = vmatpush1.msra.mxu0 0.0
  %259 = vmatprep.subr.mxu0 0.0
  %260 = vmatpush1.msra.mxu0 0.0
  %261 = vmatprep.subr.mxu0 0.0
  %262 = vmatpush1.msra.mxu0 0.0
  %263 = vmatprep.subr.mxu0 0.0
  %264 = vmatpush1.msra.mxu0 0.0
  %265 = vmatprep.subr.mxu0 0.0
  %266 = vmatpush1.msra.mxu0 0.0
  %267 = vmatprep.subr.mxu0 0.0
  %268 = vmatpush1.msra.mxu0 0.0
  %269 = vmatprep.subr.mxu0 0.0
  %270 = vmatpush1.msra.mxu0 0.0
  %271 = vmatprep.subr.mxu0 0.0
  %272 = vmatpush1.msra.mxu0 0.0
  %273 = vmatprep.subr.mxu0 0.0
  %274 = vmatpush1.msra.mxu0 0.0
  %275 = vmatprep.subr.mxu0 0.0
  %276 = vmatpush1.msra.mxu0 0.0
  %277 = vmatprep.subr.mxu0 0.0
  %278 = vmatpush1.msra.mxu0 0.0
  %279 = vmatprep.subr.mxu0 0.0
  %280 = vmatpush1.msra.mxu0 0.0
  %281 = vmatprep.subr.mxu0 0.0
  %282 = vmatpush1.msra.mxu0 0.0
  %283 = vmatprep.subr.mxu0 0.0
  %284 = vmatpush1.msra.mxu0 0.0
  %285 = vmatprep.subr.mxu0 0.0
  %286 = vmatpush1.msra.mxu0 0.0
  %287 = vmatprep.subr.mxu0 0.0
  %288 = vmatpush1.msra.mxu0 0.0
  %289 = vmatprep.subr.mxu0 0.0
  %290 = vmatpush1.msra.mxu0 0.0
  %291 = vmatprep.subr.mxu0 0.0
  %292 = vmatpush1.msra.mxu0 0.0
  %293 = vmatprep.subr.mxu0 0.0
  %294 = vmatpush1.msra.mxu0 0.0
  %295 = vmatprep.subr.mxu0 0.0
  %296 = vmatpush1.msra.mxu0 0.0
  %297 = vmatprep.subr.mxu0 0.0
  %298 = vmatpush1.msra.mxu0 0.0
  %299 = vmatprep.subr.mxu0 0.0
  %300 = vmatpush1.msra.mxu0 0.0
  %301 = vmatprep.subr.mxu0 0.0
  %302 = vmatpush1.msra.mxu0 0.0
  %303 = vmatprep.subr.mxu0 0.0
  %304 = vmatpush1.msra.mxu0 0.0
  %305 = vmatprep.subr.mxu0 0.0
  %306 = vmatpush1.msra.mxu0 0.0
  %307 = vmatprep.subr.mxu0 0.0
  %308 = vmatpush1.msra.mxu0 0.0
  %309 = vmatprep.subr.mxu0 0.0
  %310 = vmatpush1.msra.mxu0 0.0
  %311 = vmatprep.subr.mxu0 0.0
  %312 = vmatpush1.msra.mxu0 0.0
  %313 = vmatprep.subr.mxu0 0.0
  %314 = vmatpush1.msra.mxu0 0.0
  %315 = vmatprep.mubr.f32.mxu0 0.0
  %316 = vmatmul.mubr.f32.gmra.mrb[0].mxu0 %v245
  %v317 = vpop.f32.mrb[0].mxu0
  %v318 = vadd.f32 %v242, %v317
  %v319 = vpop.f32.mrb[0].mxu0
  %320 = vdwg.mxu0
  %v321 = vxor.u32 %v318, 2147483648
  %v322 = vmul.f32 %v321, 1.442695
  %v323 = vpow.pop %v322
  %v324 = vadd.f32 %v323, 1.0
  %v325 = vrcp.pop %v324
  %v326 = vmul.f32 1.0, %v325
  %327 = vst [vmem:[%s7] sm:$0x1] %v326
  // Predicated region
  $region30: #{mlp_forward.1} parent=0 // pred_check
    _
  $region31: #{mlp_forward.1} parent=0 // pred_check_branch
    %329 = sbr.rel (0) target = $region33
  $region32: #{mlp_forward.1} parent=0 // pred_region
    _
  $region33: #{mlp_forward.1} parent=0 // pred_fallthru
    _
  // Predicated region
  $region34: #{mlp_forward.1} parent=0 // pred_check
    _
  $region35: #{mlp_forward.1} parent=0 // pred_check_branch
    %331 = sbr.rel (0) target = $region37
  $region36: #{mlp_forward.1} parent=0 // pred_region
    _
  $region37: #{mlp_forward.1} parent=0 // pred_fallthru
    _

</llo_original>
